<compile_context>
chip_gen: v7x
topology: tpu7x:2x2x1
jax: 0.10.0
libtpu: 0.0.40
codegen_flags: <defaults>
</compile_context>

<pallas_src>
import functools

import jax
import jax.numpy as jnp
from jax.experimental import pallas as pl
from jax.experimental.pallas import tpu as pltpu


LANE = 128  # vreg lane width / MXU edge


def _cdiv(a, b):
    return -(-a // b)


def _round_up(x, m):
    return _cdiv(x, m) * m


def _pad2(a, rows, cols):
    return jnp.pad(a, ((0, rows - a.shape[0]), (0, cols - a.shape[1])))


def _mlp_kernel(in_ref, w1_ref, b1_ref, w2_ref, b2_ref, w3_ref, b3_ref, out_ref):
    # ----- Layer 1: Linear (single matmul over the concatenated input) + SiLU
    h1 = jnp.dot(in_ref[...], w1_ref[...], preferred_element_type=jnp.float32)
    h1 = h1 + b1_ref[...]                 # (1, H) f32 bias broadcasts on sublanes
    h1 = h1 * jax.nn.sigmoid(h1)          # SiLU in f32 (EUP sigmoid)

    # ----- Layer 2: Linear + SiLU
    h2 = jnp.dot(h1.astype(w2_ref.dtype), w2_ref[...],
                 preferred_element_type=jnp.float32)
    h2 = h2 + b2_ref[...]
    h2 = h2 * jax.nn.sigmoid(h2)

    # ----- Layer 3: Linear (output head)
    out = jnp.dot(h2.astype(w3_ref.dtype), w3_ref[...],
                  preferred_element_type=jnp.float32)
    out_ref[...] = (out + b3_ref[...]).astype(out_ref.dtype)


def prepare_params(params, num_waypoints, waypoint_dim, time_dim, cond_dim,
                   compute_dtype=jnp.bfloat16):
    """Pad weights to 128-lane multiples and cast once (hoisted out of forward).

    Weights are stored transposed vs PyTorch: [in_features, out_features],
    so the kernel computes x @ W + b directly.
    """
    w1, b1, w2, b2, w3, b3 = params
    d_x = num_waypoints * waypoint_dim
    d_in = d_x + time_dim + cond_dim
    hidden2 = w1.shape[1]
    out_dim = w3.shape[1]

    din_p = _round_up(d_in, LANE)
    h_p = _round_up(hidden2, LANE)
    do_p = _round_up(out_dim, LANE)

    w1p = _pad2(w1, din_p, h_p).astype(compute_dtype)
    b1p = _pad2(b1.reshape(1, -1), 1, h_p).astype(jnp.float32)
    w2p = _pad2(w2, h_p, h_p).astype(compute_dtype)
    b2p = _pad2(b2.reshape(1, -1), 1, h_p).astype(jnp.float32)
    w3p = _pad2(w3, h_p, do_p).astype(compute_dtype)
    b3p = _pad2(b3.reshape(1, -1), 1, do_p).astype(jnp.float32)
    return (w1p, b1p, w2p, b2p, w3p, b3p)


def diffusion_waypoint_predictor(x, time_embed, condition, prepared,
                                 num_waypoints, waypoint_dim,
                                 compute_dtype=jnp.bfloat16, batch_tile=256):
    """Mirrors DiffusionWaypointPredictor.forward using pre-padded weights."""
    batch = x.shape[0]
    w1p, b1p, w2p, b2p, w3p, b3p = prepared
    din_p, h_p = w1p.shape
    do_p = w3p.shape[1]
    out_dim = num_waypoints * waypoint_dim

    # Single concatenated layer-1 input (one MXU pass instead of three).
    x_flat = x.reshape(batch, -1)
    model_in = jnp.concatenate([x_flat, time_embed, condition], axis=1)

    # Batch tiling: align to the sublane minimum for the compute dtype,
    # never over-pad small batches, and aim for >=2 grid steps (v7x megacore)
    # when the batch is large enough.
    sub = 8 * (4 // jnp.dtype(compute_dtype).itemsize)      # 8 for f32, 16 for bf16
    tile = max(sub, min(batch_tile, _round_up(_cdiv(batch, 2), sub)))
    num_tiles = _cdiv(batch, tile)
    b_pad = num_tiles * tile

    inp = _pad2(model_in, b_pad, din_p).astype(compute_dtype)

    # Activations: tiled along batch (pipelined). Weights/biases: constant
    # index_map + single-buffered -> fetched once, VMEM-resident across tiles.
    act_spec = lambda cols: pl.BlockSpec((tile, cols), lambda i: (i, 0))
    res_spec = lambda r, c: pl.BlockSpec((r, c), lambda i: (0, 0),
                                         pipeline_mode=pl.Buffered(1))

    # Explicit VMEM budget: resident weights (single-buffered) + double-buffered
    # activation tiles + f32 intermediates, with headroom.
    cdb = jnp.dtype(compute_dtype).itemsize
    w_bytes = (w1p.size + w2p.size + w3p.size) * cdb \
        + (b1p.size + b2p.size + b3p.size) * 4 * 8        # biases sublane-padded
    a_bytes = 2 * tile * (din_p * cdb + do_p * 4)          # in/out, 2 buffers
    s_bytes = 2 * tile * h_p * 4                           # h1/h2 f32
    vmem_limit = int(min(max(2 * (w_bytes + a_bytes + s_bytes), 32 * 2**20),
                         100 * 2**20))

    out_padded = pl.pallas_call(
        _mlp_kernel,
        out_shape=jax.ShapeDtypeStruct((b_pad, do_p), jnp.float32),
        grid=(num_tiles,),
        in_specs=[
            act_spec(din_p),
            res_spec(din_p, h_p), res_spec(1, h_p),
            res_spec(h_p, h_p), res_spec(1, h_p),
            res_spec(h_p, do_p), res_spec(1, do_p),
        ],
        out_specs=act_spec(do_p),
        compiler_params=pltpu.CompilerParams(
            dimension_semantics=("parallel",),             # v7x: shard over 2 TCs
            vmem_limit_bytes=vmem_limit),
    )(inp, w1p, b1p, w2p, b2p, w3p, b3p)

    # Slice padding off and restore [B, num_waypoints, waypoint_dim].
    return out_padded[:batch, :out_dim].reshape(batch, num_waypoints, waypoint_dim)


def init_params(key, hidden_dim, waypoint_dim, num_waypoints):
    """Deterministic synthetic init matching nn.Linear defaults.

    Weights are stored transposed vs PyTorch: [in_features, out_features].
    """
    in_dim = hidden_dim + num_waypoints * waypoint_dim + hidden_dim
    dims = [(in_dim, hidden_dim * 2),
            (hidden_dim * 2, hidden_dim * 2),
            (hidden_dim * 2, num_waypoints * waypoint_dim)]
    params = []
    for (fan_in, fan_out) in dims:
        key, kw, kb = jax.random.split(key, 3)
        bound = 1.0 / jnp.sqrt(fan_in)
        w = jax.random.uniform(kw, (fan_in, fan_out), jnp.float32, -bound, bound)
        b = jax.random.uniform(kb, (1, fan_out), jnp.float32, -bound, bound)
        params.extend([w, b])
    return tuple(params)


if __name__ == "__main__":
    hidden_dim = 32
    waypoint_dim = 2
    num_waypoints = 5
    batch = 2

    key = jax.random.PRNGKey(0)
    k_x, k_t, k_c, k_p = jax.random.split(key, 4)

    x = jax.random.normal(k_x, (batch, num_waypoints, waypoint_dim), jnp.float32)
    time_embed = jax.random.normal(k_t, (batch, hidden_dim), jnp.float32)
    condition = jax.random.normal(k_c, (batch, hidden_dim), jnp.float32)

    params = init_params(k_p, hidden_dim, waypoint_dim, num_waypoints)

    # Pure-JAX f32 reference (same math, no Pallas).
    w1, b1, w2, b2, w3, b3 = params
    inp = jnp.concatenate([x.reshape(batch, -1), time_embed, condition], axis=1)
    h1 = jax.nn.silu(inp @ w1 + b1)
    h2 = jax.nn.silu(h1 @ w2 + b2)
    ref = (h2 @ w3 + b3).reshape(batch, num_waypoints, waypoint_dim)

    # ---- Default fast path: bf16 operands, f32 accumulation ----
    prep_bf16 = prepare_params(params, num_waypoints, waypoint_dim,
                               hidden_dim, hidden_dim, jnp.bfloat16)
    fwd_bf16 = jax.jit(functools.partial(diffusion_waypoint_predictor,
                                         num_waypoints=num_waypoints,
                                         waypoint_dim=waypoint_dim,
                                         compute_dtype=jnp.bfloat16))
    out_bf16 = jax.block_until_ready(fwd_bf16(x, time_embed, condition, prep_bf16))
    assert out_bf16.shape == (batch, num_waypoints, waypoint_dim)
    # bf16 operand rounding -> loose tolerance vs the f32 reference.
    assert jnp.allclose(out_bf16, ref, atol=3e-2, rtol=3e-2), "bf16 path mismatch"

    # ---- f32 operand path: tight reference check ----
    prep_f32 = prepare_params(params, num_waypoints, waypoint_dim,
                              hidden_dim, hidden_dim, jnp.float32)
    fwd_f32 = jax.jit(functools.partial(diffusion_waypoint_predictor,
                                        num_waypoints=num_waypoints,
                                        waypoint_dim=waypoint_dim,
                                        compute_dtype=jnp.float32))
    out_f32 = jax.block_until_ready(fwd_f32(x, time_embed, condition, prep_f32))
    assert jnp.allclose(out_f32, ref, atol=1e-4, rtol=1e-4), "f32 path mismatch"

    print("KERNEL_OK")
</pallas_src>

<mosaic_0001>
module attributes {stable_mosaic.version = 11 : i64} {
  func.func @_mlp_kernel(%arg0: i32, %arg1: memref<16x128xbf16, #tpu.memory_space<vmem>>, %arg2: memref<128x128xbf16, #tpu.memory_space<vmem>>, %arg3: memref<1x128xf32, #tpu.memory_space<vmem>>, %arg4: memref<128x128xbf16, #tpu.memory_space<vmem>>, %arg5: memref<1x128xf32, #tpu.memory_space<vmem>>, %arg6: memref<128x128xbf16, #tpu.memory_space<vmem>>, %arg7: memref<1x128xf32, #tpu.memory_space<vmem>>, %arg8: memref<16x128xf32, #tpu.memory_space<vmem>>) attributes {dimension_semantics = [#tpu.dimension_semantics<parallel>], iteration_bounds = array<i64: 1>, scalar_prefetch = 0 : i64, scratch_operands = 0 : i64, tpu.core_type = #tpu.core_type<tc>, window_params = [{transform_indices = @transform_0, window_bounds = array<i64: 16, 128>}, {pipeline_mode = #tpu.pipeline_mode<synchronous>, transform_indices = @transform_1, window_bounds = array<i64: 128, 128>}, {pipeline_mode = #tpu.pipeline_mode<synchronous>, transform_indices = @transform_2, window_bounds = array<i64: 1, 128>}, {pipeline_mode = #tpu.pipeline_mode<synchronous>, transform_indices = @transform_3, window_bounds = array<i64: 128, 128>}, {pipeline_mode = #tpu.pipeline_mode<synchronous>, transform_indices = @transform_4, window_bounds = array<i64: 1, 128>}, {pipeline_mode = #tpu.pipeline_mode<synchronous>, transform_indices = @transform_5, window_bounds = array<i64: 128, 128>}, {pipeline_mode = #tpu.pipeline_mode<synchronous>, transform_indices = @transform_6, window_bounds = array<i64: 1, 128>}, {transform_indices = @transform_7, window_bounds = array<i64: 16, 128>}]} {
    %c0 = arith.constant 0 : index
    %c0_0 = arith.constant 0 : index
    %0 = vector.load %arg1[%c0, %c0_0] : memref<16x128xbf16, #tpu.memory_space<vmem>>, vector<16x128xbf16>
    %c0_1 = arith.constant 0 : index
    %c0_2 = arith.constant 0 : index
    %1 = vector.load %arg2[%c0_1, %c0_2] : memref<128x128xbf16, #tpu.memory_space<vmem>>, vector<128x128xbf16>
    %cst = arith.constant dense<0.000000e+00> : vector<16x128xf32>
    %2 = tpu.matmul %0, %1, %cst {dimension_numbers = #tpu.dot_dimension_numbers<[1], [0], [0], [1], [0, 0, 1, 1], [], []>} : vector<16x128xbf16>, vector<128x128xbf16>, vector<16x128xf32> -> vector<16x128xf32>
    %c0_3 = arith.constant 0 : index
    %c0_4 = arith.constant 0 : index
    %3 = vector.load %arg3[%c0_3, %c0_4] : memref<1x128xf32, #tpu.memory_space<vmem>>, vector<1x128xf32>
    %4 = vector.broadcast %3 : vector<1x128xf32> to vector<16x128xf32>
    %5 = arith.addf %2, %4 : vector<16x128xf32>
    %6 = arith.negf %5 : vector<16x128xf32>
    %7 = math.exp %6 : vector<16x128xf32>
    %cst_5 = arith.constant 1.000000e+00 : f32
    %8 = vector.broadcast %cst_5 : f32 to vector<16x128xf32>
    %9 = arith.addf %8, %7 : vector<16x128xf32>
    %10 = arith.divf %8, %9 : vector<16x128xf32>
    %11 = arith.mulf %5, %10 : vector<16x128xf32>
    %12 = arith.truncf %11 : vector<16x128xf32> to vector<16x128xbf16>
    %c0_6 = arith.constant 0 : index
    %c0_7 = arith.constant 0 : index
    %13 = vector.load %arg4[%c0_6, %c0_7] : memref<128x128xbf16, #tpu.memory_space<vmem>>, vector<128x128xbf16>
    %cst_8 = arith.constant dense<0.000000e+00> : vector<16x128xf32>
    %14 = tpu.matmul %12, %13, %cst_8 {dimension_numbers = #tpu.dot_dimension_numbers<[1], [0], [0], [1], [0, 0, 1, 1], [], []>} : vector<16x128xbf16>, vector<128x128xbf16>, vector<16x128xf32> -> vector<16x128xf32>
    %c0_9 = arith.constant 0 : index
    %c0_10 = arith.constant 0 : index
    %15 = vector.load %arg5[%c0_9, %c0_10] : memref<1x128xf32, #tpu.memory_space<vmem>>, vector<1x128xf32>
    %16 = vector.broadcast %15 : vector<1x128xf32> to vector<16x128xf32>
    %17 = arith.addf %14, %16 : vector<16x128xf32>
    %18 = arith.negf %17 : vector<16x128xf32>
    %19 = math.exp %18 : vector<16x128xf32>
    %cst_11 = arith.constant 1.000000e+00 : f32
    %20 = vector.broadcast %cst_11 : f32 to vector<16x128xf32>
    %21 = arith.addf %20, %19 : vector<16x128xf32>
    %22 = arith.divf %20, %21 : vector<16x128xf32>
    %23 = arith.mulf %17, %22 : vector<16x128xf32>
    %24 = arith.truncf %23 : vector<16x128xf32> to vector<16x128xbf16>
    %c0_12 = arith.constant 0 : index
    %c0_13 = arith.constant 0 : index
    %25 = vector.load %arg6[%c0_12, %c0_13] : memref<128x128xbf16, #tpu.memory_space<vmem>>, vector<128x128xbf16>
    %cst_14 = arith.constant dense<0.000000e+00> : vector<16x128xf32>
    %26 = tpu.matmul %24, %25, %cst_14 {dimension_numbers = #tpu.dot_dimension_numbers<[1], [0], [0], [1], [0, 0, 1, 1], [], []>} : vector<16x128xbf16>, vector<128x128xbf16>, vector<16x128xf32> -> vector<16x128xf32>
    %c0_15 = arith.constant 0 : index
    %c0_16 = arith.constant 0 : index
    %27 = vector.load %arg7[%c0_15, %c0_16] : memref<1x128xf32, #tpu.memory_space<vmem>>, vector<1x128xf32>
    %28 = vector.broadcast %27 : vector<1x128xf32> to vector<16x128xf32>
    %29 = arith.addf %26, %28 : vector<16x128xf32>
    %c0_17 = arith.constant 0 : index
    %c0_18 = arith.constant 0 : index
    %30 = vector.load %arg8[%c0_17, %c0_18] : memref<16x128xf32, #tpu.memory_space<vmem>>, vector<16x128xf32>
    tpu.vector_store %arg8[%c0_17, %c0_18], %29 {strides = array<i32>} : memref<16x128xf32, #tpu.memory_space<vmem>>, vector<16x128xf32>,
    return
  }
  func.func @transform_0(%arg0: i32) -> (i32, i32) {
    %c0_i32 = arith.constant 0 : i32
    %c0_i32_0 = arith.constant 0 : i32
    return %arg0, %c0_i32 : i32, i32
  }
  func.func @transform_1(%arg0: i32) -> (i32, i32) {
    %c0_i32 = arith.constant 0 : i32
    %c0_i32_0 = arith.constant 0 : i32
    %c0_i32_1 = arith.constant 0 : i32
    return %c0_i32, %c0_i32_0 : i32, i32
  }
  func.func @transform_2(%arg0: i32) -> (i32, i32) {
    %c0_i32 = arith.constant 0 : i32
    %c0_i32_0 = arith.constant 0 : i32
    %c0_i32_1 = arith.constant 0 : i32
    return %c0_i32, %c0_i32_0 : i32, i32
  }
  func.func @transform_3(%arg0: i32) -> (i32, i32) {
    %c0_i32 = arith.constant 0 : i32
    %c0_i32_0 = arith.constant 0 : i32
    %c0_i32_1 = arith.constant 0 : i32
    return %c0_i32, %c0_i32_0 : i32, i32
  }
  func.func @transform_4(%arg0: i32) -> (i32, i32) {
    %c0_i32 = arith.constant 0 : i32
    %c0_i32_0 = arith.constant 0 : i32
    %c0_i32_1 = arith.constant 0 : i32
    return %c0_i32, %c0_i32_0 : i32, i32
  }
  func.func @transform_5(%arg0: i32) -> (i32, i32) {
    %c0_i32 = arith.constant 0 : i32
    %c0_i32_0 = arith.constant 0 : i32
    %c0_i32_1 = arith.constant 0 : i32
    return %c0_i32, %c0_i32_0 : i32, i32
  }
  func.func @transform_6(%arg0: i32) -> (i32, i32) {
    %c0_i32 = arith.constant 0 : i32
    %c0_i32_0 = arith.constant 0 : i32
    %c0_i32_1 = arith.constant 0 : i32
    return %c0_i32, %c0_i32_0 : i32, i32
  }
  func.func @transform_7(%arg0: i32) -> (i32, i32) {
    %c0_i32 = arith.constant 0 : i32
    %c0_i32_0 = arith.constant 0 : i32
    return %arg0, %c0_i32 : i32, i32
  }
}

</mosaic_0001>

<llo_original>
// kernel: diffusion_waypoint_predictor.1
$region0: #{diffusion_waypoint_predictor.1}
  #allocation0 [shape = 'u32[]', space=smem, size = 0x4, offset = 0x4, fixed_abs, tag = 'smem constant byte address 0x4 - core index']
  #allocation1 [shape = 'u32[144,128]{1,0:T(1,128)}', space=vmem, size = 0x12000, scoped, tag = 'internal scratch']
  %s0 = inlined_call_operand.vmem [shape: bf16[16,128], index: 0, kind: input, shape index: {}]
  %s1 = inlined_call_operand.hbm [shape: bf16[128,128], index: 1, kind: input, shape index: {}]
  %s2 = inlined_call_operand.vmem [shape: f32[1,128], index: 2, kind: input, shape index: {}]
  %s3 = inlined_call_operand.hbm [shape: bf16[128,128], index: 3, kind: input, shape index: {}]
  %s4 = inlined_call_operand.vmem [shape: f32[1,128], index: 4, kind: input, shape index: {}]
  %s5 = inlined_call_operand.vmem [shape: bf16[128,128], index: 5, kind: input, shape index: {}]
  %s6 = inlined_call_operand.vmem [shape: f32[1,128], index: 6, kind: input, shape index: {}]
  %s7 = inlined_call_operand.vmem [shape: f32[16,128], index: 7, kind: output, shape index: {}]
  %s8 = sld [smem:[#allocation0]]
  $region46: #{diffusion_waypoint_predictor.1} parent=0
    _
  %s10 = ssub.s32 1, %s8
  %s11 = scalar_select 0, %s10, %s8
  $region1: #{diffusion_waypoint_predictor.1} parent=0
    #allocation2 [shape = 'u8[32768]{0}', space=vmem, size = 0x8000, scoped, tag = 'input window, operand 1, single buffered']
    #allocation3 [shape = 's32[1]{0}', space=sflag, size = 0x4, scoped, tag = 'scoped memory for diffusion_waypoint_predictor.1']
    #allocation4 [shape = 'u8[32768]{0}', space=vmem, size = 0x8000, scoped, tag = 'input window, operand 3, single buffered']
    #allocation5 [shape = 's32[1]{0}', space=sflag, size = 0x4, scoped, tag = 'scoped memory for diffusion_waypoint_predictor.1']
    %12 = vsyncpa [#allocation3], 0
    %13 = vsyncpa [#allocation5], 0
    // Predicated region
    $region2: #{diffusion_waypoint_predictor.1} parent=1 // pred_check
      _
    $region3: #{diffusion_waypoint_predictor.1} parent=1 // pred_check_branch
      %15 = sbr.rel (0) target = $region5
    $region4: #{diffusion_waypoint_predictor.1} parent=1 // pred_region
      _
    $region5: #{diffusion_waypoint_predictor.1} parent=1 // pred_fallthru
      _
    // Predicated region
    $region6: #{diffusion_waypoint_predictor.1} parent=1 // pred_check
      _
    $region7: #{diffusion_waypoint_predictor.1} parent=1 // pred_check_branch
      %17 = sbr.rel (0) target = $region9
    $region8: #{diffusion_waypoint_predictor.1} parent=1 // pred_region
      %s19 = ssub.s32 1024, 1024
      %20 = vsyncadd [#allocation3], %s19
      %s21 = sshll.u32 [#allocation2], 4
      %s22 = int_to_ptr.vmem [resolvable:$true] %s21
      %27 = dma.hbm_to_vmem [thread:$0]  %s1, 1024, %s22, [#allocation3], 64, 64, 4
    $region9: #{diffusion_waypoint_predictor.1} parent=1 // pred_fallthru
      _
    // Predicated region
    $region10: #{diffusion_waypoint_predictor.1} parent=1 // pred_check
      _
    $region11: #{diffusion_waypoint_predictor.1} parent=1 // pred_check_branch
      %29 = sbr.rel (0) target = $region13
    $region12: #{diffusion_waypoint_predictor.1} parent=1 // pred_region
      _
    $region13: #{diffusion_waypoint_predictor.1} parent=1 // pred_fallthru
      _
    // Predicated region
    $region14: #{diffusion_waypoint_predictor.1} parent=1 // pred_check
      _
    $region15: #{diffusion_waypoint_predictor.1} parent=1 // pred_check_branch
      %31 = sbr.rel (0) target = $region17
    $region16: #{diffusion_waypoint_predictor.1} parent=1 // pred_region
      %s33 = ssub.s32 1024, 1024
      %34 = vsyncadd [#allocation5], %s33
      %s35 = sshll.u32 [#allocation4], 4
      %s36 = int_to_ptr.vmem [resolvable:$true] %s35
      %41 = dma.hbm_to_vmem [thread:$0]  %s3, 1024, %s36, [#allocation5], 64, 64, 4
    $region17: #{diffusion_waypoint_predictor.1} parent=1 // pred_fallthru
      _
    // Predicated region
    $region18: #{diffusion_waypoint_predictor.1} parent=1 // pred_check
      _
    $region19: #{diffusion_waypoint_predictor.1} parent=1 // pred_check_branch
      %43 = sbr.rel (0) target = $region21
    $region20: #{diffusion_waypoint_predictor.1} parent=1 // pred_region
      _
    $region21: #{diffusion_waypoint_predictor.1} parent=1 // pred_fallthru
      _
    // Predicated region
    $region22: #{diffusion_waypoint_predictor.1} parent=1 // pred_check
      _
    $region23: #{diffusion_waypoint_predictor.1} parent=1 // pred_check_branch
      %45 = sbr.rel (0) target = $region25
    $region24: #{diffusion_waypoint_predictor.1} parent=1 // pred_region
      _
    $region25: #{diffusion_waypoint_predictor.1} parent=1 // pred_fallthru
      _
    // Predicated region
    $region26: #{diffusion_waypoint_predictor.1} parent=1 // pred_check
      _
    $region27: #{diffusion_waypoint_predictor.1} parent=1 // pred_check_branch
      %47 = sbr.rel (0) target = $region29
    $region28: #{diffusion_waypoint_predictor.1} parent=1 // pred_region
      _
    $region29: #{diffusion_waypoint_predictor.1} parent=1 // pred_fallthru
      _
    // Predicated region
    $region30: #{diffusion_waypoint_predictor.1} parent=1 // pred_check
      _
    $region31: #{diffusion_waypoint_predictor.1} parent=1 // pred_check_branch
      %49 = sbr.rel (0) target = $region33
    $region32: #{diffusion_waypoint_predictor.1} parent=1 // pred_region
      %50 = dma.done [#allocation3], 1024
    $region33: #{diffusion_waypoint_predictor.1} parent=1 // pred_fallthru
      _
    // Predicated region
    $region34: #{diffusion_waypoint_predictor.1} parent=1 // pred_check
      _
    $region35: #{diffusion_waypoint_predictor.1} parent=1 // pred_check_branch
      %52 = sbr.rel (0) target = $region37
    $region36: #{diffusion_waypoint_predictor.1} parent=1 // pred_region
      %53 = dma.done [#allocation5], 1024
    $region37: #{diffusion_waypoint_predictor.1} parent=1 // pred_fallthru
      _
    %v55 = vld [vmem:[%s0] sm:$0xf]
    %v56 = vld [vmem:[%s0 + $0x4] sm:$0xf]
    %v57 = vld [vmem:[#allocation2] sm:$0xf]
    %v58 = vld [vmem:[#allocation2 + $0x4] sm:$0xf]
    %v59 = vld [vmem:[#allocation2 + $0x8] sm:$0xf]
    %v60 = vld [vmem:[#allocation2 + $0xc] sm:$0xf]
    %v61 = vld [vmem:[#allocation2 + $0x10] sm:$0xf]
    %v62 = vld [vmem:[#allocation2 + $0x14] sm:$0xf]
    %v63 = vld [vmem:[#allocation2 + $0x18] sm:$0xf]
    %v64 = vld [vmem:[#allocation2 + $0x1c] sm:$0xf]
    %v65 = vld [vmem:[#allocation2 + $0x20] sm:$0xf]
    %v66 = vld [vmem:[#allocation2 + $0x24] sm:$0xf]
    %v67 = vld [vmem:[#allocation2 + $0x28] sm:$0xf]
    %v68 = vld [vmem:[#allocation2 + $0x2c] sm:$0xf]
    %v69 = vld [vmem:[#allocation2 + $0x30] sm:$0xf]
    %v70 = vld [vmem:[#allocation2 + $0x34] sm:$0xf]
    %v71 = vld [vmem:[#allocation2 + $0x38] sm:$0xf]
    %v72 = vld [vmem:[#allocation2 + $0x3c] sm:$0xf]
    %v73 = vld [vmem:[%s2] sm:$0x1]
    %v75 = vlaneseq
    %v76 = vshrl.u32 %v75, 7
    %v77 = vsub.s32 0, %v76
    %v78 = vrot.slane %v73, %v77
    %v82 = vunpack.c.l.b16 %v55
    %v83 = vunpack.c.l.b16 %v56
    %v84 = vpack.c.b16 %v83, %v82
    %v102 = vunpack.c.l.b16 %v57
    %v103 = vunpack.c.l.b16 %v58
    %v104 = vunpack.c.l.b16 %v59
    %v105 = vunpack.c.l.b16 %v60
    %v106 = vunpack.c.l.b16 %v61
    %v107 = vunpack.c.l.b16 %v62
    %v108 = vunpack.c.l.b16 %v63
    %v109 = vunpack.c.l.b16 %v64
    %v110 = vunpack.c.l.b16 %v65
    %v111 = vunpack.c.l.b16 %v66
    %v112 = vunpack.c.l.b16 %v67
    %v113 = vunpack.c.l.b16 %v68
    %v114 = vunpack.c.l.b16 %v69
    %v115 = vunpack.c.l.b16 %v70
    %v116 = vunpack.c.l.b16 %v71
    %v117 = vunpack.c.l.b16 %v72
    %v118 = vpack.c.b16 %v103, %v102
    %v119 = vpack.c.b16 %v105, %v104
    %v120 = vpack.c.b16 %v107, %v106
    %v121 = vpack.c.b16 %v109, %v108
    %v122 = vpack.c.b16 %v111, %v110
    %v123 = vpack.c.b16 %v113, %v112
    %v124 = vpack.c.b16 %v115, %v114
    %v125 = vpack.c.b16 %v117, %v116
    %134 = vmatprep.subr.bf16.mxu0 0
    %135 = vmatpush1.bf16.msra.mxu0 %v118
    %136 = vmatprep.subr.bf16.mxu0 0
    %137 = vmatpush1.bf16.msra.mxu0 %v119
    %138 = vmatprep.subr.bf16.mxu0 0
    %139 = vmatpush1.bf16.msra.mxu0 %v120
    %140 = vmatprep.subr.bf16.mxu0 0
    %141 = vmatpush1.bf16.msra.mxu0 %v121
    %142 = vmatprep.subr.bf16.mxu0 0
    %143 = vmatpush1.bf16.msra.mxu0 %v122
    %144 = vmatprep.subr.bf16.mxu0 0
    %145 = vmatpush1.bf16.msra.mxu0 %v123
    %146 = vmatprep.subr.bf16.mxu0 0
    %147 = vmatpush1.bf16.msra.mxu0 %v124
    %148 = vmatprep.subr.bf16.mxu0 0
    %149 = vmatpush1.bf16.msra.mxu0 %v125
    %150 = vmatprep.subr.bf16.mxu0 0
    %151 = vmatpush1.bf16.msra.mxu0 0
    %152 = vmatprep.subr.bf16.mxu0 0
    %153 = vmatpush1.bf16.msra.mxu0 0
    %154 = vmatprep.subr.bf16.mxu0 0
    %155 = vmatpush1.bf16.msra.mxu0 0
    %156 = vmatprep.subr.bf16.mxu0 0
    %157 = vmatpush1.bf16.msra.mxu0 0
    %158 = vmatprep.subr.bf16.mxu0 0
    %159 = vmatpush1.bf16.msra.mxu0 0
    %160 = vmatprep.subr.bf16.mxu0 0
    %161 = vmatpush1.bf16.msra.mxu0 0
    %162 = vmatprep.subr.bf16.mxu0 0
    %163 = vmatpush1.bf16.msra.mxu0 0
    %164 = vmatprep.subr.bf16.mxu0 0
    %165 = vmatpush1.bf16.msra.mxu0 0
    %166 = vmatprep.mubr.bf16.mxu0 0
    %167 = vmatmul.mubr.bf16.gmra.mrb[0].mxu0 %v84
    %v168 = vpop.f32.mrb[0].mxu0
    %v169 = vadd.f32 %v78, %v168
    %v170 = vpop.f32.mrb[0].mxu0
    %v171 = vpop.f32.mrb[0].mxu0
    %v172 = vadd.f32 %v78, %v171
    %v173 = vpop.f32.mrb[0].mxu0
    %174 = vdwg.mxu0
    %v175 = vxor.u32 %v169, 2147483648
    %v176 = vxor.u32 %v172, 2147483648
    %v177 = vmul.f32 %v175, 1.442695
    %v178 = vpow.pop %v177
    %v179 = vmul.f32 %v176, 1.442695
    %v180 = vpow.pop %v179
    %v181 = vadd.f32 %v178, 1.0
    %v182 = vadd.f32 %v180, 1.0
    %v183 = vrcp.pop %v181
    %v184 = vmul.f32 1.0, %v183
    %v185 = vrcp.pop %v182
    %v186 = vmul.f32 1.0, %v185
    %v187 = vmul.f32 %v169, %v184
    %v188 = vmul.f32 %v172, %v186
    %v189 = vpack.c.bf16 %v188, %v187
    %v190 = vld [vmem:[#allocation4] sm:$0xf]
    %v191 = vld [vmem:[#allocation4 + $0x4] sm:$0xf]
    %v192 = vld [vmem:[#allocation4 + $0x8] sm:$0xf]
    %v193 = vld [vmem:[#allocation4 + $0xc] sm:$0xf]
    %v194 = vld [vmem:[#allocation4 + $0x10] sm:$0xf]
    %v195 = vld [vmem:[#allocation4 + $0x14] sm:$0xf]
    %v196 = vld [vmem:[#allocation4 + $0x18] sm:$0xf]
    %v197 = vld [vmem:[#allocation4 + $0x1c] sm:$0xf]
    %v198 = vld [vmem:[#allocation4 + $0x20] sm:$0xf]
    %v199 = vld [vmem:[#allocation4 + $0x24] sm:$0xf]
    %v200 = vld [vmem:[#allocation4 + $0x28] sm:$0xf]
    %v201 = vld [vmem:[#allocation4 + $0x2c] sm:$0xf]
    %v202 = vld [vmem:[#allocation4 + $0x30] sm:$0xf]
    %v203 = vld [vmem:[#allocation4 + $0x34] sm:$0xf]
    %v204 = vld [vmem:[#allocation4 + $0x38] sm:$0xf]
    %v205 = vld [vmem:[#allocation4 + $0x3c] sm:$0xf]
    %v206 = vld [vmem:[%s4] sm:$0x1]
    %v208 = vlaneseq
    %v209 = vshrl.u32 %v208, 7
    %v210 = vsub.s32 0, %v209
    %v211 = vrot.slane %v206, %v210
    %v229 = vunpack.c.l.b16 %v190
    %v230 = vunpack.c.l.b16 %v191
    %v231 = vunpack.c.l.b16 %v192
    %v232 = vunpack.c.l.b16 %v193
    %v233 = vunpack.c.l.b16 %v194
    %v234 = vunpack.c.l.b16 %v195
    %v235 = vunpack.c.l.b16 %v196
    %v236 = vunpack.c.l.b16 %v197
    %v237 = vunpack.c.l.b16 %v198
    %v238 = vunpack.c.l.b16 %v199
    %v239 = vunpack.c.l.b16 %v200
    %v240 = vunpack.c.l.b16 %v201
    %v241 = vunpack.c.l.b16 %v202
    %v242 = vunpack.c.l.b16 %v203
    %v243 = vunpack.c.l.b16 %v204
    %v244 = vunpack.c.l.b16 %v205
    %v245 = vpack.c.b16 %v230, %v229
    %v246 = vpack.c.b16 %v232, %v231
    %v247 = vpack.c.b16 %v234, %v233
    %v248 = vpack.c.b16 %v236, %v235
    %v249 = vpack.c.b16 %v238, %v237
    %v250 = vpack.c.b16 %v240, %v239
    %v251 = vpack.c.b16 %v242, %v241
    %v252 = vpack.c.b16 %v244, %v243
    %261 = vmatprep.subr.bf16.mxu0 0
    %262 = vmatpush1.bf16.msra.mxu0 %v245
    %263 = vmatprep.subr.bf16.mxu0 0
    %264 = vmatpush1.bf16.msra.mxu0 %v246
    %265 = vmatprep.subr.bf16.mxu0 0
    %266 = vmatpush1.bf16.msra.mxu0 %v247
    %267 = vmatprep.subr.bf16.mxu0 0
    %268 = vmatpush1.bf16.msra.mxu0 %v248
    %269 = vmatprep.subr.bf16.mxu0 0
    %270 = vmatpush1.bf16.msra.mxu0 %v249
    %271 = vmatprep.subr.bf16.mxu0 0
    %272 = vmatpush1.bf16.msra.mxu0 %v250
    %273 = vmatprep.subr.bf16.mxu0 0
    %274 = vmatpush1.bf16.msra.mxu0 %v251
    %275 = vmatprep.subr.bf16.mxu0 0
    %276 = vmatpush1.bf16.msra.mxu0 %v252
    %277 = vmatprep.subr.bf16.mxu0 0
    %278 = vmatpush1.bf16.msra.mxu0 0
    %279 = vmatprep.subr.bf16.mxu0 0
    %280 = vmatpush1.bf16.msra.mxu0 0
    %281 = vmatprep.subr.bf16.mxu0 0
    %282 = vmatpush1.bf16.msra.mxu0 0
    %283 = vmatprep.subr.bf16.mxu0 0
    %284 = vmatpush1.bf16.msra.mxu0 0
    %285 = vmatprep.subr.bf16.mxu0 0
    %286 = vmatpush1.bf16.msra.mxu0 0
    %287 = vmatprep.subr.bf16.mxu0 0
    %288 = vmatpush1.bf16.msra.mxu0 0
    %289 = vmatprep.subr.bf16.mxu0 0
    %290 = vmatpush1.bf16.msra.mxu0 0
    %291 = vmatprep.subr.bf16.mxu0 0
    %292 = vmatpush1.bf16.msra.mxu0 0
    %293 = vmatprep.mubr.bf16.mxu0 0
    %294 = vmatmul.mubr.bf16.gmra.mrb[0].mxu0 %v189
    %v295 = vpop.f32.mrb[0].mxu0
    %v296 = vadd.f32 %v211, %v295
    %v297 = vpop.f32.mrb[0].mxu0
    %v298 = vpop.f32.mrb[0].mxu0
    %v299 = vadd.f32 %v211, %v298
    %v300 = vpop.f32.mrb[0].mxu0
    %301 = vdwg.mxu0
    %v302 = vxor.u32 %v296, 2147483648
    %v303 = vxor.u32 %v299, 2147483648
    %v304 = vmul.f32 %v302, 1.442695
    %v305 = vpow.pop %v304
    %v306 = vmul.f32 %v303, 1.442695
    %v307 = vpow.pop %v306
    %v308 = vadd.f32 %v305, 1.0
    %v309 = vadd.f32 %v307, 1.0
    %v310 = vrcp.pop %v308
    %v311 = vmul.f32 1.0, %v310
    %v312 = vrcp.pop %v309
    %v313 = vmul.f32 1.0, %v312
    %v314 = vmul.f32 %v296, %v311
    %v315 = vmul.f32 %v299, %v313
    %v316 = vpack.c.bf16 %v315, %v314
    %v317 = vld [vmem:[%s5] sm:$0xf]
    %v318 = vld [vmem:[%s5 + $0x4] sm:$0xf]
    %v319 = vld [vmem:[%s5 + $0x8] sm:$0xf]
    %v320 = vld [vmem:[%s5 + $0xc] sm:$0xf]
    %v321 = vld [vmem:[%s5 + $0x10] sm:$0xf]
    %v322 = vld [vmem:[%s5 + $0x14] sm:$0xf]
    %v323 = vld [vmem:[%s5 + $0x18] sm:$0xf]
    %v324 = vld [vmem:[%s5 + $0x1c] sm:$0xf]
    %v325 = vld [vmem:[%s5 + $0x20] sm:$0xf]
    %v326 = vld [vmem:[%s5 + $0x24] sm:$0xf]
    %v327 = vld [vmem:[%s5 + $0x28] sm:$0xf]
    %v328 = vld [vmem:[%s5 + $0x2c] sm:$0xf]
    %v329 = vld [vmem:[%s5 + $0x30] sm:$0xf]
    %v330 = vld [vmem:[%s5 + $0x34] sm:$0xf]
    %v331 = vld [vmem:[%s5 + $0x38] sm:$0xf]
    %v332 = vld [vmem:[%s5 + $0x3c] sm:$0xf]
    %v333 = vld [vmem:[%s6] sm:$0x1]
    %v335 = vlaneseq
    %v336 = vshrl.u32 %v335, 7
    %v337 = vsub.s32 0, %v336
    %v338 = vrot.slane %v333, %v337
    %v356 = vunpack.c.l.b16 %v317
    %v357 = vunpack.c.l.b16 %v318
    %v358 = vunpack.c.l.b16 %v319
    %v359 = vunpack.c.l.b16 %v320
    %v360 = vunpack.c.l.b16 %v321
    %v361 = vunpack.c.l.b16 %v322
    %v362 = vunpack.c.l.b16 %v323
    %v363 = vunpack.c.l.b16 %v324
    %v364 = vunpack.c.l.b16 %v325
    %v365 = vunpack.c.l.b16 %v326
    %v366 = vunpack.c.l.b16 %v327
    %v367 = vunpack.c.l.b16 %v328
    %v368 = vunpack.c.l.b16 %v329
    %v369 = vunpack.c.l.b16 %v330
    %v370 = vunpack.c.l.b16 %v331
    %v371 = vunpack.c.l.b16 %v332
    %v372 = vpack.c.b16 %v357, %v356
    %v373 = vpack.c.b16 %v359, %v358
    %v374 = vpack.c.b16 %v361, %v360
    %v375 = vpack.c.b16 %v363, %v362
    %v376 = vpack.c.b16 %v365, %v364
    %v377 = vpack.c.b16 %v367, %v366
    %v378 = vpack.c.b16 %v369, %v368
    %v379 = vpack.c.b16 %v371, %v370
    %388 = vmatprep.subr.bf16.mxu0 0
    %389 = vmatpush1.bf16.msra.mxu0 %v372
    %390 = vmatprep.subr.bf16.mxu0 0
    %391 = vmatpush1.bf16.msra.mxu0 %v373
    %392 = vmatprep.subr.bf16.mxu0 0
    %393 = vmatpush1.bf16.msra.mxu0 %v374
    %394 = vmatprep.subr.bf16.mxu0 0
    %395 = vmatpush1.bf16.msra.mxu0 %v375
    %396 = vmatprep.subr.bf16.mxu0 0
    %397 = vmatpush1.bf16.msra.mxu0 %v376
    %398 = vmatprep.subr.bf16.mxu0 0
    %399 = vmatpush1.bf16.msra.mxu0 %v377
    %400 = vmatprep.subr.bf16.mxu0 0
    %401 = vmatpush1.bf16.msra.mxu0 %v378
    %402 = vmatprep.subr.bf16.mxu0 0
    %403 = vmatpush1.bf16.msra.mxu0 %v379
    %404 = vmatprep.subr.bf16.mxu0 0
    %405 = vmatpush1.bf16.msra.mxu0 0
    %406 = vmatprep.subr.bf16.mxu0 0
    %407 = vmatpush1.bf16.msra.mxu0 0
    %408 = vmatprep.subr.bf16.mxu0 0
    %409 = vmatpush1.bf16.msra.mxu0 0
    %410 = vmatprep.subr.bf16.mxu0 0
    %411 = vmatpush1.bf16.msra.mxu0 0
    %412 = vmatprep.subr.bf16.mxu0 0
    %413 = vmatpush1.bf16.msra.mxu0 0
    %414 = vmatprep.subr.bf16.mxu0 0
    %415 = vmatpush1.bf16.msra.mxu0 0
    %416 = vmatprep.subr.bf16.mxu0 0
    %417 = vmatpush1.bf16.msra.mxu0 0
    %418 = vmatprep.subr.bf16.mxu0 0
    %419 = vmatpush1.bf16.msra.mxu0 0
    %420 = vmatprep.mubr.bf16.mxu0 0
    %421 = vmatmul.mubr.bf16.gmra.mrb[0].mxu0 %v316
    %v422 = vpop.f32.mrb[0].mxu0
    %v423 = vadd.f32 %v338, %v422
    %v424 = vpop.f32.mrb[0].mxu0
    %v425 = vpop.f32.mrb[0].mxu0
    %v426 = vadd.f32 %v338, %v425
    %v427 = vpop.f32.mrb[0].mxu0
    %428 = vdwg.mxu0
    %429 = vst [vmem:[%s7] sm:$0xff] %v423
    %430 = vst [vmem:[%s7 + $0x8] sm:$0xff] %v426
    // Predicated region
    $region38: #{diffusion_waypoint_predictor.1} parent=1 // pred_check
      _
    $region39: #{diffusion_waypoint_predictor.1} parent=1 // pred_check_branch
      %432 = sbr.rel (0) target = $region41
    $region40: #{diffusion_waypoint_predictor.1} parent=1 // pred_region
      _
    $region41: #{diffusion_waypoint_predictor.1} parent=1 // pred_fallthru
      _
    // Predicated region
    $region42: #{diffusion_waypoint_predictor.1} parent=1 // pred_check
      _
    $region43: #{diffusion_waypoint_predictor.1} parent=1 // pred_check_branch
      %434 = sbr.rel (0) target = $region45
    $region44: #{diffusion_waypoint_predictor.1} parent=1 // pred_region
      _
    $region45: #{diffusion_waypoint_predictor.1} parent=1 // pred_fallthru
      _
    %435 = vsyncpa [#allocation3], 1
    %436 = vsyncpa [#allocation5], 1

</llo_original>
